<compile_context>
chip_gen: v7x
topology: tpu7x:2x2x1
jax: 0.10.0
libtpu: 0.0.40
codegen_flags: <defaults>
</compile_context>

<pallas_src>
import jax
import jax.numpy as jnp
from jax.experimental import pallas as pl
from jax.experimental.pallas import tpu as pltpu


def _lstm_recurrence_kernel(gx_ref, whh_ref, hseq_ref):
    """Sequential part of the forward pass (single grid step, whole batch).

    gx_ref  : (T, B, 3k)  precomputed x @ W_ih^T + (b_ih + b_hh), gates [i,g,o]
                          with the g-columns pre-scaled by 2 (see wrapper).
    whh_ref : (k, 3k)     hidden->gate weights (transposed, forget gate removed,
                          g-columns pre-scaled by 2).
    hseq_ref: (T, B, k)   hidden states h_t for every step (kernel output).
    """
    T, B, _ = gx_ref.shape
    k = whh_ref.shape[0]

    # Loop-invariant work hoisted out of the recurrence:
    #   - recurrent weights stay resident in vregs/VMEM for all T steps,
    #   - activation fix-up vectors built once, already at full (B, 3k) shape so
    #     no broadcast_in_dim is re-emitted inside the unrolled loop.
    whh = whh_ref[...]                                              # (k, 3k)
    col = jax.lax.broadcasted_iota(jnp.int32, (B, 3 * k), 1)
    is_g = jnp.logical_and(col >= k, col < 2 * k)
    a_fix = jnp.where(is_g, 2.0, 1.0).astype(jnp.float32)           # (B, 3k)
    c_fix = jnp.where(is_g, -1.0, 0.0).astype(jnp.float32)          # (B, 3k)

    def step(t, h):
        # Only the recurrent projection + gate nonlinearity stay on the
        # per-step critical path.
        gates = (jnp.dot(h, whh, preferred_element_type=jnp.float32)
                 + gx_ref[t])                                       # (B, 3k)

        # ONE sigmoid pass over all 3k gate lanes; the g-columns were fed 2*z,
        # so tanh(z) = 2*sigmoid(2z) - 1 is recovered by the affine fix-up.
        s = jax.nn.sigmoid(gates)
        act = a_fix * s + c_fix                                     # VPU only

        i_g = act[:, 0 * k:1 * k]
        g_g = act[:, 1 * k:2 * k]
        o_g = act[:, 2 * k:3 * k]

        # Previous cell state is always zero in the reference module: c = i*g.
        h_new = o_g * jnp.tanh(i_g * g_g)
        hseq_ref[t] = h_new
        return h_new

    # Short static trip count -> fully unroll for LLO scheduling visibility.
    jax.lax.fori_loop(0, T, step, jnp.zeros((B, k), jnp.float32), unroll=True)


def lstm_model_forward(inputs, params):
    """inputs: (B, T, m+1) float32 -> logits (B, T, m)."""
    B, T, _ = inputs.shape
    k = params["w_hh"].shape[1]
    m = params["w_v"].shape[0]

    w_ih = params["w_ih"]                                  # (4k, m+1)
    w_hh = params["w_hh"]                                  # (4k, k)
    b = params["b_ih"] + params["b_hh"]                    # (4k,)

    # PyTorch LSTMCell gate order is [i, f, g, o]; drop the dead forget gate
    # and pre-scale the g rows by 2 (tanh via a single sigmoid pass in-kernel).
    wih3 = jnp.concatenate(
        [w_ih[:k], 2.0 * w_ih[2 * k:3 * k], w_ih[3 * k:]], axis=0)   # (3k, m+1)
    whh3_t = jnp.concatenate(
        [w_hh[:k], 2.0 * w_hh[2 * k:3 * k], w_hh[3 * k:]], axis=0).T  # (k, 3k)
    b3 = jnp.concatenate([b[:k], 2.0 * b[2 * k:3 * k], b[3 * k:]])    # (3k,)

    # Hoisted input projection for ALL timesteps as one batched matmul,
    # produced time-major so the kernel indexes the leading (time) axis.
    gx = (jnp.einsum('bti,gi->tbg', inputs, wih3) + b3).astype(jnp.float32)

    # Single grid step: whole batch in one invocation (no serial grid overhead,
    # full MXU M dim on 1-TC chips).  Blocks cover the full arrays.
    h_seq = pl.pallas_call(
        _lstm_recurrence_kernel,
        out_shape=jax.ShapeDtypeStruct((T, B, k), jnp.float32),
        grid_spec=pltpu.PrefetchScalarGridSpec(
            num_scalar_prefetch=0,
            grid=(1,),
            in_specs=[
                pl.BlockSpec((T, B, 3 * k), lambda i: (0, 0, 0)),   # gates_x
                pl.BlockSpec((k, 3 * k), lambda i: (0, 0)),         # W_hh^T
            ],
            out_specs=pl.BlockSpec((T, B, k), lambda i: (0, 0, 0)),  # H
        ),
        compiler_params=pltpu.CompilerParams(
            dimension_semantics=("arbitrary",)),
    )(gx, whh3_t)                                                    # (T, B, k)

    # Output projection hoisted out of the recurrence: one (T*B, k) @ (k, m)
    # matmul on all hidden states at once.
    logits = jnp.einsum('tbk,mk->btm', h_seq, params["w_v"]) + params["b_v"]
    return logits                                                    # (B, T, m)


def lstm_model_reference(inputs, params):
    """Pure-JAX reference reproducing the PyTorch forward (c never carried)."""
    B, T, _ = inputs.shape
    k = params["w_hh"].shape[1]
    h = jnp.zeros((B, k), jnp.float32)
    outs = []
    for t in range(T):
        x = inputs[:, t, :]
        gates = (x @ params["w_ih"].T + params["b_ih"]
                 + h @ params["w_hh"].T + params["b_hh"])
        i_g, f_g, g_g, o_g = jnp.split(gates, 4, axis=-1)
        i_g = jax.nn.sigmoid(i_g)
        f_g = jax.nn.sigmoid(f_g)
        g_g = jnp.tanh(g_g)
        o_g = jax.nn.sigmoid(o_g)
        c = i_g * g_g                    # previous cell state is always zero
        h = o_g * jnp.tanh(c)
        outs.append(h @ params["w_v"].T + params["b_v"])
    return jnp.stack(outs, axis=1)


def init_params(key, m, k):
    # Deterministic init mimicking PyTorch's default U(-1/sqrt(k), 1/sqrt(k)).
    bound = 1.0 / float(jnp.sqrt(jnp.float32(k)))
    ks = jax.random.split(key, 6)
    u = lambda kk, shape: jax.random.uniform(kk, shape, jnp.float32, -bound, bound)
    return {
        "w_ih": u(ks[0], (4 * k, m + 1)),   # LSTMCell weight_ih
        "w_hh": u(ks[1], (4 * k, k)),       # LSTMCell weight_hh
        "b_ih": u(ks[2], (4 * k,)),
        "b_hh": u(ks[3], (4 * k,)),
        "w_v":  u(ks[4], (m, k)),           # Linear(k, m)
        "b_v":  u(ks[5], (m,)),
    }


if __name__ == "__main__":
    m, k = 8, 32          # input per step = m+1 = 9, hidden = 32
    B, T = 16, 8
    key = jax.random.PRNGKey(0)
    kp, kx = jax.random.split(key)
    params = init_params(kp, m, k)
    x = jax.random.normal(kx, (B, T, m + 1), jnp.float32)

    out = jax.block_until_ready(lstm_model_forward(x, params))
    ref = lstm_model_reference(x, params)

    assert out.shape == (B, T, m), out.shape
    assert jnp.allclose(out, ref, atol=1e-4, rtol=1e-4), \
        float(jnp.max(jnp.abs(out - ref)))
    print("KERNEL_OK")
</pallas_src>

<mosaic_0001>
module attributes {stable_mosaic.version = 11 : i64} {
  func.func @_lstm_recurrence_kernel(%arg0: i32, %arg1: memref<8x16x96xf32, #tpu.memory_space<vmem>>, %arg2: memref<32x96xf32, #tpu.memory_space<vmem>>, %arg3: memref<8x16x32xf32, #tpu.memory_space<vmem>>) attributes {dimension_semantics = [#tpu.dimension_semantics<arbitrary>], iteration_bounds = array<i64: 1>, scalar_prefetch = 0 : i64, scratch_operands = 0 : i64, tpu.core_type = #tpu.core_type<tc>, window_params = [{pipeline_mode = #tpu.pipeline_mode<synchronous>, transform_indices = @transform_0, window_bounds = array<i64: 8, 16, 96>}, {pipeline_mode = #tpu.pipeline_mode<synchronous>, transform_indices = @transform_1, window_bounds = array<i64: 32, 96>}, {pipeline_mode = #tpu.pipeline_mode<synchronous>, transform_indices = @transform_2, window_bounds = array<i64: 8, 16, 32>}]} {
    %c0 = arith.constant 0 : index
    %c0_0 = arith.constant 0 : index
    %0 = vector.load %arg2[%c0, %c0_0] : memref<32x96xf32, #tpu.memory_space<vmem>>, vector<32x96xf32>
    %1 = tpu.iota {dimensions = array<i32: 1>} : vector<16x96xi32>
    %c32_i32 = arith.constant 32 : i32
    %2 = vector.broadcast %c32_i32 : i32 to vector<16x96xi32>
    %3 = arith.cmpi sge, %1, %2 : vector<16x96xi32>
    %c64_i32 = arith.constant 64 : i32
    %4 = vector.broadcast %c64_i32 : i32 to vector<16x96xi32>
    %5 = arith.cmpi slt, %1, %4 : vector<16x96xi32>
    %6 = arith.andi %3, %5 : vector<16x96xi1>
    %cst = arith.constant 2.000000e+00 : f32
    %cst_1 = arith.constant 1.000000e+00 : f32
    %7 = vector.broadcast %cst : f32 to vector<16x96xf32>
    %8 = vector.broadcast %cst_1 : f32 to vector<16x96xf32>
    %9 = arith.select %6, %7, %8 : vector<16x96xi1>, vector<16x96xf32>
    %cst_2 = arith.constant -1.000000e+00 : f32
    %cst_3 = arith.constant 0.000000e+00 : f32
    %10 = vector.broadcast %cst_2 : f32 to vector<16x96xf32>
    %11 = vector.broadcast %cst_3 : f32 to vector<16x96xf32>
    %12 = arith.select %6, %10, %11 : vector<16x96xi1>, vector<16x96xf32>
    %cst_4 = arith.constant 0.000000e+00 : f32
    %13 = vector.broadcast %cst_4 : f32 to vector<16x32xf32>
    %c0_i32 = arith.constant 0 : i32
    %cst_5 = arith.constant dense<0.000000e+00> : vector<16x96xf32>
    %14 = tpu.matmul %13, %0, %cst_5 {dimension_numbers = #tpu.dot_dimension_numbers<[1], [0], [0], [1], [0, 0, 1, 1], [], []>} : vector<16x32xf32>, vector<32x96xf32>, vector<16x96xf32> -> vector<16x96xf32>
    %15 = arith.index_cast %c0_i32 : i32 to index
    %c0_6 = arith.constant 0 : index
    %c0_7 = arith.constant 0 : index
    %16 = vector.load %arg1[%15, %c0_6, %c0_7] : memref<8x16x96xf32, #tpu.memory_space<vmem>>, vector<1x16x96xf32>
    %17 = vector.shape_cast %16 : vector<1x16x96xf32> to vector<16x96xf32>
    %18 = arith.addf %14, %17 : vector<16x96xf32>
    %19 = arith.negf %18 : vector<16x96xf32>
    %20 = math.exp %19 : vector<16x96xf32>
    %cst_8 = arith.constant 1.000000e+00 : f32
    %21 = vector.broadcast %cst_8 : f32 to vector<16x96xf32>
    %22 = arith.addf %21, %20 : vector<16x96xf32>
    %23 = arith.divf %21, %22 : vector<16x96xf32>
    %24 = arith.mulf %9, %23 : vector<16x96xf32>
    %25 = arith.addf %24, %12 : vector<16x96xf32>
    %26 = vector.extract_strided_slice %25 {offsets = [0, 0], sizes = [16, 32], strides = [1, 1]} : vector<16x96xf32> to vector<16x32xf32>
    %27 = vector.extract_strided_slice %25 {offsets = [0, 32], sizes = [16, 32], strides = [1, 1]} : vector<16x96xf32> to vector<16x32xf32>
    %28 = vector.extract_strided_slice %25 {offsets = [0, 64], sizes = [16, 32], strides = [1, 1]} : vector<16x96xf32> to vector<16x32xf32>
    %29 = arith.mulf %26, %27 : vector<16x32xf32>
    %30 = math.tanh %29 : vector<16x32xf32>
    %31 = arith.mulf %28, %30 : vector<16x32xf32>
    %32 = arith.index_cast %c0_i32 : i32 to index
    %c0_9 = arith.constant 0 : index
    %c0_10 = arith.constant 0 : index
    %33 = vector.load %arg3[%32, %c0_9, %c0_10] : memref<8x16x32xf32, #tpu.memory_space<vmem>>, vector<1x16x32xf32>
    %34 = vector.shape_cast %33 : vector<1x16x32xf32> to vector<16x32xf32>
    %35 = vector.shape_cast %31 : vector<16x32xf32> to vector<1x16x32xf32>
    tpu.vector_store %arg3[%32, %c0_9, %c0_10], %35 {strides = array<i32>} : memref<8x16x32xf32, #tpu.memory_space<vmem>>, vector<1x16x32xf32>,
    %c1_i32 = arith.constant 1 : i32
    %cst_11 = arith.constant dense<0.000000e+00> : vector<16x96xf32>
    %36 = tpu.matmul %31, %0, %cst_11 {dimension_numbers = #tpu.dot_dimension_numbers<[1], [0], [0], [1], [0, 0, 1, 1], [], []>} : vector<16x32xf32>, vector<32x96xf32>, vector<16x96xf32> -> vector<16x96xf32>
    %37 = arith.index_cast %c1_i32 : i32 to index
    %c0_12 = arith.constant 0 : index
    %c0_13 = arith.constant 0 : index
    %38 = vector.load %arg1[%37, %c0_12, %c0_13] : memref<8x16x96xf32, #tpu.memory_space<vmem>>, vector<1x16x96xf32>
    %39 = vector.shape_cast %38 : vector<1x16x96xf32> to vector<16x96xf32>
    %40 = arith.addf %36, %39 : vector<16x96xf32>
    %41 = arith.negf %40 : vector<16x96xf32>
    %42 = math.exp %41 : vector<16x96xf32>
    %cst_14 = arith.constant 1.000000e+00 : f32
    %43 = vector.broadcast %cst_14 : f32 to vector<16x96xf32>
    %44 = arith.addf %43, %42 : vector<16x96xf32>
    %45 = arith.divf %43, %44 : vector<16x96xf32>
    %46 = arith.mulf %9, %45 : vector<16x96xf32>
    %47 = arith.addf %46, %12 : vector<16x96xf32>
    %48 = vector.extract_strided_slice %47 {offsets = [0, 0], sizes = [16, 32], strides = [1, 1]} : vector<16x96xf32> to vector<16x32xf32>
    %49 = vector.extract_strided_slice %47 {offsets = [0, 32], sizes = [16, 32], strides = [1, 1]} : vector<16x96xf32> to vector<16x32xf32>
    %50 = vector.extract_strided_slice %47 {offsets = [0, 64], sizes = [16, 32], strides = [1, 1]} : vector<16x96xf32> to vector<16x32xf32>
    %51 = arith.mulf %48, %49 : vector<16x32xf32>
    %52 = math.tanh %51 : vector<16x32xf32>
    %53 = arith.mulf %50, %52 : vector<16x32xf32>
    %54 = arith.index_cast %c1_i32 : i32 to index
    %c0_15 = arith.constant 0 : index
    %c0_16 = arith.constant 0 : index
    %55 = vector.load %arg3[%54, %c0_15, %c0_16] : memref<8x16x32xf32, #tpu.memory_space<vmem>>, vector<1x16x32xf32>
    %56 = vector.shape_cast %55 : vector<1x16x32xf32> to vector<16x32xf32>
    %57 = vector.shape_cast %53 : vector<16x32xf32> to vector<1x16x32xf32>
    tpu.vector_store %arg3[%54, %c0_15, %c0_16], %57 {strides = array<i32>} : memref<8x16x32xf32, #tpu.memory_space<vmem>>, vector<1x16x32xf32>,
    %c2_i32 = arith.constant 2 : i32
    %cst_17 = arith.constant dense<0.000000e+00> : vector<16x96xf32>
    %58 = tpu.matmul %53, %0, %cst_17 {dimension_numbers = #tpu.dot_dimension_numbers<[1], [0], [0], [1], [0, 0, 1, 1], [], []>} : vector<16x32xf32>, vector<32x96xf32>, vector<16x96xf32> -> vector<16x96xf32>
    %59 = arith.index_cast %c2_i32 : i32 to index
    %c0_18 = arith.constant 0 : index
    %c0_19 = arith.constant 0 : index
    %60 = vector.load %arg1[%59, %c0_18, %c0_19] : memref<8x16x96xf32, #tpu.memory_space<vmem>>, vector<1x16x96xf32>
    %61 = vector.shape_cast %60 : vector<1x16x96xf32> to vector<16x96xf32>
    %62 = arith.addf %58, %61 : vector<16x96xf32>
    %63 = arith.negf %62 : vector<16x96xf32>
    %64 = math.exp %63 : vector<16x96xf32>
    %cst_20 = arith.constant 1.000000e+00 : f32
    %65 = vector.broadcast %cst_20 : f32 to vector<16x96xf32>
    %66 = arith.addf %65, %64 : vector<16x96xf32>
    %67 = arith.divf %65, %66 : vector<16x96xf32>
    %68 = arith.mulf %9, %67 : vector<16x96xf32>
    %69 = arith.addf %68, %12 : vector<16x96xf32>
    %70 = vector.extract_strided_slice %69 {offsets = [0, 0], sizes = [16, 32], strides = [1, 1]} : vector<16x96xf32> to vector<16x32xf32>
    %71 = vector.extract_strided_slice %69 {offsets = [0, 32], sizes = [16, 32], strides = [1, 1]} : vector<16x96xf32> to vector<16x32xf32>
    %72 = vector.extract_strided_slice %69 {offsets = [0, 64], sizes = [16, 32], strides = [1, 1]} : vector<16x96xf32> to vector<16x32xf32>
    %73 = arith.mulf %70, %71 : vector<16x32xf32>
    %74 = math.tanh %73 : vector<16x32xf32>
    %75 = arith.mulf %72, %74 : vector<16x32xf32>
    %76 = arith.index_cast %c2_i32 : i32 to index
    %c0_21 = arith.constant 0 : index
    %c0_22 = arith.constant 0 : index
    %77 = vector.load %arg3[%76, %c0_21, %c0_22] : memref<8x16x32xf32, #tpu.memory_space<vmem>>, vector<1x16x32xf32>
    %78 = vector.shape_cast %77 : vector<1x16x32xf32> to vector<16x32xf32>
    %79 = vector.shape_cast %75 : vector<16x32xf32> to vector<1x16x32xf32>
    tpu.vector_store %arg3[%76, %c0_21, %c0_22], %79 {strides = array<i32>} : memref<8x16x32xf32, #tpu.memory_space<vmem>>, vector<1x16x32xf32>,
    %c3_i32 = arith.constant 3 : i32
    %cst_23 = arith.constant dense<0.000000e+00> : vector<16x96xf32>
    %80 = tpu.matmul %75, %0, %cst_23 {dimension_numbers = #tpu.dot_dimension_numbers<[1], [0], [0], [1], [0, 0, 1, 1], [], []>} : vector<16x32xf32>, vector<32x96xf32>, vector<16x96xf32> -> vector<16x96xf32>
    %81 = arith.index_cast %c3_i32 : i32 to index
    %c0_24 = arith.constant 0 : index
    %c0_25 = arith.constant 0 : index
    %82 = vector.load %arg1[%81, %c0_24, %c0_25] : memref<8x16x96xf32, #tpu.memory_space<vmem>>, vector<1x16x96xf32>
    %83 = vector.shape_cast %82 : vector<1x16x96xf32> to vector<16x96xf32>
    %84 = arith.addf %80, %83 : vector<16x96xf32>
    %85 = arith.negf %84 : vector<16x96xf32>
    %86 = math.exp %85 : vector<16x96xf32>
    %cst_26 = arith.constant 1.000000e+00 : f32
    %87 = vector.broadcast %cst_26 : f32 to vector<16x96xf32>
    %88 = arith.addf %87, %86 : vector<16x96xf32>
    %89 = arith.divf %87, %88 : vector<16x96xf32>
    %90 = arith.mulf %9, %89 : vector<16x96xf32>
    %91 = arith.addf %90, %12 : vector<16x96xf32>
    %92 = vector.extract_strided_slice %91 {offsets = [0, 0], sizes = [16, 32], strides = [1, 1]} : vector<16x96xf32> to vector<16x32xf32>
    %93 = vector.extract_strided_slice %91 {offsets = [0, 32], sizes = [16, 32], strides = [1, 1]} : vector<16x96xf32> to vector<16x32xf32>
    %94 = vector.extract_strided_slice %91 {offsets = [0, 64], sizes = [16, 32], strides = [1, 1]} : vector<16x96xf32> to vector<16x32xf32>
    %95 = arith.mulf %92, %93 : vector<16x32xf32>
    %96 = math.tanh %95 : vector<16x32xf32>
    %97 = arith.mulf %94, %96 : vector<16x32xf32>
    %98 = arith.index_cast %c3_i32 : i32 to index
    %c0_27 = arith.constant 0 : index
    %c0_28 = arith.constant 0 : index
    %99 = vector.load %arg3[%98, %c0_27, %c0_28] : memref<8x16x32xf32, #tpu.memory_space<vmem>>, vector<1x16x32xf32>
    %100 = vector.shape_cast %99 : vector<1x16x32xf32> to vector<16x32xf32>
    %101 = vector.shape_cast %97 : vector<16x32xf32> to vector<1x16x32xf32>
    tpu.vector_store %arg3[%98, %c0_27, %c0_28], %101 {strides = array<i32>} : memref<8x16x32xf32, #tpu.memory_space<vmem>>, vector<1x16x32xf32>,
    %c4_i32 = arith.constant 4 : i32
    %cst_29 = arith.constant dense<0.000000e+00> : vector<16x96xf32>
    %102 = tpu.matmul %97, %0, %cst_29 {dimension_numbers = #tpu.dot_dimension_numbers<[1], [0], [0], [1], [0, 0, 1, 1], [], []>} : vector<16x32xf32>, vector<32x96xf32>, vector<16x96xf32> -> vector<16x96xf32>
    %103 = arith.index_cast %c4_i32 : i32 to index
    %c0_30 = arith.constant 0 : index
    %c0_31 = arith.constant 0 : index
    %104 = vector.load %arg1[%103, %c0_30, %c0_31] : memref<8x16x96xf32, #tpu.memory_space<vmem>>, vector<1x16x96xf32>
    %105 = vector.shape_cast %104 : vector<1x16x96xf32> to vector<16x96xf32>
    %106 = arith.addf %102, %105 : vector<16x96xf32>
    %107 = arith.negf %106 : vector<16x96xf32>
    %108 = math.exp %107 : vector<16x96xf32>
    %cst_32 = arith.constant 1.000000e+00 : f32
    %109 = vector.broadcast %cst_32 : f32 to vector<16x96xf32>
    %110 = arith.addf %109, %108 : vector<16x96xf32>
    %111 = arith.divf %109, %110 : vector<16x96xf32>
    %112 = arith.mulf %9, %111 : vector<16x96xf32>
    %113 = arith.addf %112, %12 : vector<16x96xf32>
    %114 = vector.extract_strided_slice %113 {offsets = [0, 0], sizes = [16, 32], strides = [1, 1]} : vector<16x96xf32> to vector<16x32xf32>
    %115 = vector.extract_strided_slice %113 {offsets = [0, 32], sizes = [16, 32], strides = [1, 1]} : vector<16x96xf32> to vector<16x32xf32>
    %116 = vector.extract_strided_slice %113 {offsets = [0, 64], sizes = [16, 32], strides = [1, 1]} : vector<16x96xf32> to vector<16x32xf32>
    %117 = arith.mulf %114, %115 : vector<16x32xf32>
    %118 = math.tanh %117 : vector<16x32xf32>
    %119 = arith.mulf %116, %118 : vector<16x32xf32>
    %120 = arith.index_cast %c4_i32 : i32 to index
    %c0_33 = arith.constant 0 : index
    %c0_34 = arith.constant 0 : index
    %121 = vector.load %arg3[%120, %c0_33, %c0_34] : memref<8x16x32xf32, #tpu.memory_space<vmem>>, vector<1x16x32xf32>
    %122 = vector.shape_cast %121 : vector<1x16x32xf32> to vector<16x32xf32>
    %123 = vector.shape_cast %119 : vector<16x32xf32> to vector<1x16x32xf32>
    tpu.vector_store %arg3[%120, %c0_33, %c0_34], %123 {strides = array<i32>} : memref<8x16x32xf32, #tpu.memory_space<vmem>>, vector<1x16x32xf32>,
    %c5_i32 = arith.constant 5 : i32
    %cst_35 = arith.constant dense<0.000000e+00> : vector<16x96xf32>
    %124 = tpu.matmul %119, %0, %cst_35 {dimension_numbers = #tpu.dot_dimension_numbers<[1], [0], [0], [1], [0, 0, 1, 1], [], []>} : vector<16x32xf32>, vector<32x96xf32>, vector<16x96xf32> -> vector<16x96xf32>
    %125 = arith.index_cast %c5_i32 : i32 to index
    %c0_36 = arith.constant 0 : index
    %c0_37 = arith.constant 0 : index
    %126 = vector.load %arg1[%125, %c0_36, %c0_37] : memref<8x16x96xf32, #tpu.memory_space<vmem>>, vector<1x16x96xf32>
    %127 = vector.shape_cast %126 : vector<1x16x96xf32> to vector<16x96xf32>
    %128 = arith.addf %124, %127 : vector<16x96xf32>
    %129 = arith.negf %128 : vector<16x96xf32>
    %130 = math.exp %129 : vector<16x96xf32>
    %cst_38 = arith.constant 1.000000e+00 : f32
    %131 = vector.broadcast %cst_38 : f32 to vector<16x96xf32>
    %132 = arith.addf %131, %130 : vector<16x96xf32>
    %133 = arith.divf %131, %132 : vector<16x96xf32>
    %134 = arith.mulf %9, %133 : vector<16x96xf32>
    %135 = arith.addf %134, %12 : vector<16x96xf32>
    %136 = vector.extract_strided_slice %135 {offsets = [0, 0], sizes = [16, 32], strides = [1, 1]} : vector<16x96xf32> to vector<16x32xf32>
    %137 = vector.extract_strided_slice %135 {offsets = [0, 32], sizes = [16, 32], strides = [1, 1]} : vector<16x96xf32> to vector<16x32xf32>
    %138 = vector.extract_strided_slice %135 {offsets = [0, 64], sizes = [16, 32], strides = [1, 1]} : vector<16x96xf32> to vector<16x32xf32>
    %139 = arith.mulf %136, %137 : vector<16x32xf32>
    %140 = math.tanh %139 : vector<16x32xf32>
    %141 = arith.mulf %138, %140 : vector<16x32xf32>
    %142 = arith.index_cast %c5_i32 : i32 to index
    %c0_39 = arith.constant 0 : index
    %c0_40 = arith.constant 0 : index
    %143 = vector.load %arg3[%142, %c0_39, %c0_40] : memref<8x16x32xf32, #tpu.memory_space<vmem>>, vector<1x16x32xf32>
    %144 = vector.shape_cast %143 : vector<1x16x32xf32> to vector<16x32xf32>
    %145 = vector.shape_cast %141 : vector<16x32xf32> to vector<1x16x32xf32>
    tpu.vector_store %arg3[%142, %c0_39, %c0_40], %145 {strides = array<i32>} : memref<8x16x32xf32, #tpu.memory_space<vmem>>, vector<1x16x32xf32>,
    %c6_i32 = arith.constant 6 : i32
    %cst_41 = arith.constant dense<0.000000e+00> : vector<16x96xf32>
    %146 = tpu.matmul %141, %0, %cst_41 {dimension_numbers = #tpu.dot_dimension_numbers<[1], [0], [0], [1], [0, 0, 1, 1], [], []>} : vector<16x32xf32>, vector<32x96xf32>, vector<16x96xf32> -> vector<16x96xf32>
    %147 = arith.index_cast %c6_i32 : i32 to index
    %c0_42 = arith.constant 0 : index
    %c0_43 = arith.constant 0 : index
    %148 = vector.load %arg1[%147, %c0_42, %c0_43] : memref<8x16x96xf32, #tpu.memory_space<vmem>>, vector<1x16x96xf32>
    %149 = vector.shape_cast %148 : vector<1x16x96xf32> to vector<16x96xf32>
    %150 = arith.addf %146, %149 : vector<16x96xf32>
    %151 = arith.negf %150 : vector<16x96xf32>
    %152 = math.exp %151 : vector<16x96xf32>
    %cst_44 = arith.constant 1.000000e+00 : f32
    %153 = vector.broadcast %cst_44 : f32 to vector<16x96xf32>
    %154 = arith.addf %153, %152 : vector<16x96xf32>
    %155 = arith.divf %153, %154 : vector<16x96xf32>
    %156 = arith.mulf %9, %155 : vector<16x96xf32>
    %157 = arith.addf %156, %12 : vector<16x96xf32>
    %158 = vector.extract_strided_slice %157 {offsets = [0, 0], sizes = [16, 32], strides = [1, 1]} : vector<16x96xf32> to vector<16x32xf32>
    %159 = vector.extract_strided_slice %157 {offsets = [0, 32], sizes = [16, 32], strides = [1, 1]} : vector<16x96xf32> to vector<16x32xf32>
    %160 = vector.extract_strided_slice %157 {offsets = [0, 64], sizes = [16, 32], strides = [1, 1]} : vector<16x96xf32> to vector<16x32xf32>
    %161 = arith.mulf %158, %159 : vector<16x32xf32>
    %162 = math.tanh %161 : vector<16x32xf32>
    %163 = arith.mulf %160, %162 : vector<16x32xf32>
    %164 = arith.index_cast %c6_i32 : i32 to index
    %c0_45 = arith.constant 0 : index
    %c0_46 = arith.constant 0 : index
    %165 = vector.load %arg3[%164, %c0_45, %c0_46] : memref<8x16x32xf32, #tpu.memory_space<vmem>>, vector<1x16x32xf32>
    %166 = vector.shape_cast %165 : vector<1x16x32xf32> to vector<16x32xf32>
    %167 = vector.shape_cast %163 : vector<16x32xf32> to vector<1x16x32xf32>
    tpu.vector_store %arg3[%164, %c0_45, %c0_46], %167 {strides = array<i32>} : memref<8x16x32xf32, #tpu.memory_space<vmem>>, vector<1x16x32xf32>,
    %c7_i32 = arith.constant 7 : i32
    %cst_47 = arith.constant dense<0.000000e+00> : vector<16x96xf32>
    %168 = tpu.matmul %163, %0, %cst_47 {dimension_numbers = #tpu.dot_dimension_numbers<[1], [0], [0], [1], [0, 0, 1, 1], [], []>} : vector<16x32xf32>, vector<32x96xf32>, vector<16x96xf32> -> vector<16x96xf32>
    %169 = arith.index_cast %c7_i32 : i32 to index
    %c0_48 = arith.constant 0 : index
    %c0_49 = arith.constant 0 : index
    %170 = vector.load %arg1[%169, %c0_48, %c0_49] : memref<8x16x96xf32, #tpu.memory_space<vmem>>, vector<1x16x96xf32>
    %171 = vector.shape_cast %170 : vector<1x16x96xf32> to vector<16x96xf32>
    %172 = arith.addf %168, %171 : vector<16x96xf32>
    %173 = arith.negf %172 : vector<16x96xf32>
    %174 = math.exp %173 : vector<16x96xf32>
    %cst_50 = arith.constant 1.000000e+00 : f32
    %175 = vector.broadcast %cst_50 : f32 to vector<16x96xf32>
    %176 = arith.addf %175, %174 : vector<16x96xf32>
    %177 = arith.divf %175, %176 : vector<16x96xf32>
    %178 = arith.mulf %9, %177 : vector<16x96xf32>
    %179 = arith.addf %178, %12 : vector<16x96xf32>
    %180 = vector.extract_strided_slice %179 {offsets = [0, 0], sizes = [16, 32], strides = [1, 1]} : vector<16x96xf32> to vector<16x32xf32>
    %181 = vector.extract_strided_slice %179 {offsets = [0, 32], sizes = [16, 32], strides = [1, 1]} : vector<16x96xf32> to vector<16x32xf32>
    %182 = vector.extract_strided_slice %179 {offsets = [0, 64], sizes = [16, 32], strides = [1, 1]} : vector<16x96xf32> to vector<16x32xf32>
    %183 = arith.mulf %180, %181 : vector<16x32xf32>
    %184 = math.tanh %183 : vector<16x32xf32>
    %185 = arith.mulf %182, %184 : vector<16x32xf32>
    %186 = arith.index_cast %c7_i32 : i32 to index
    %c0_51 = arith.constant 0 : index
    %c0_52 = arith.constant 0 : index
    %187 = vector.load %arg3[%186, %c0_51, %c0_52] : memref<8x16x32xf32, #tpu.memory_space<vmem>>, vector<1x16x32xf32>
    %188 = vector.shape_cast %187 : vector<1x16x32xf32> to vector<16x32xf32>
    %189 = vector.shape_cast %185 : vector<16x32xf32> to vector<1x16x32xf32>
    tpu.vector_store %arg3[%186, %c0_51, %c0_52], %189 {strides = array<i32>} : memref<8x16x32xf32, #tpu.memory_space<vmem>>, vector<1x16x32xf32>,
    %c8_i32 = arith.constant 8 : i32
    return
  }
  func.func @transform_0(%arg0: i32) -> (i32, i32, i32) {
    %c0_i32 = arith.constant 0 : i32
    %c0_i32_0 = arith.constant 0 : i32
    %c0_i32_1 = arith.constant 0 : i32
    %c0_i32_2 = arith.constant 0 : i32
    return %c0_i32, %c0_i32_0, %c0_i32_1 : i32, i32, i32
  }
  func.func @transform_1(%arg0: i32) -> (i32, i32) {
    %c0_i32 = arith.constant 0 : i32
    %c0_i32_0 = arith.constant 0 : i32
    %c0_i32_1 = arith.constant 0 : i32
    return %c0_i32, %c0_i32_0 : i32, i32
  }
  func.func @transform_2(%arg0: i32) -> (i32, i32, i32) {
    %c0_i32 = arith.constant 0 : i32
    %c0_i32_0 = arith.constant 0 : i32
    %c0_i32_1 = arith.constant 0 : i32
    %c0_i32_2 = arith.constant 0 : i32
    return %c0_i32, %c0_i32_0, %c0_i32_1 : i32, i32, i32
  }
}

</mosaic_0001>

<llo_original>
// kernel: tpu_custom_call.1
$region0: #{tpu_custom_call.1}
  #allocation0 [shape = 'u32[]', space=smem, size = 0x4, offset = 0x4, fixed_abs, tag = 'smem constant byte address 0x4 - core index']
  #allocation1 [shape = 'u32[144,128]{1,0:T(1,128)}', space=vmem, size = 0x12000, scoped, tag = 'internal scratch']
  %s0 = inlined_call_operand.hbm [shape: f32[8,16,96], index: 0, kind: input, shape index: {}]
  %s1 = inlined_call_operand.hbm [shape: f32[32,96], index: 1, kind: input, shape index: {}]
  %s2 = inlined_call_operand.hbm [shape: f32[8,16,32], index: 2, kind: output, shape index: {}]
  %s3 = sld [smem:[#allocation0]]
  $region26: #{tpu_custom_call.1} parent=0
    _
  %s5 = ssub.s32 1, %s3
  %s6 = scalar_select 0, %s5, %s3
  $region1: #{tpu_custom_call.1} parent=0
    #allocation2 [shape = 'u8[65536]{0}', space=vmem, size = 0x10000, scoped, tag = 'input window, operand 0, single buffered']
    #allocation3 [shape = 's32[1]{0}', space=sflag, size = 0x4, scoped, tag = 'scoped memory for tpu_custom_call.1']
    #allocation4 [shape = 's32[1]{0}', space=sflag, size = 0x4, scoped, tag = 'scoped memory for tpu_custom_call.1']
    #allocation5 [shape = 'u8[16384]{0}', space=vmem, size = 0x4000, scoped, tag = 'input window, operand 1, single buffered']
    #allocation6 [shape = 's32[1]{0}', space=sflag, size = 0x4, scoped, tag = 'scoped memory for tpu_custom_call.1']
    #allocation7 [shape = 'u8[65536]{0}', space=vmem, size = 0x10000, scoped, tag = 'output window, operand 0, single buffered']
    %7 = vsyncpa [#allocation3], 0
    %8 = vsyncpa [#allocation6], 0
    %9 = vsyncpa [#allocation4], 0
    // Predicated region
    $region2: #{tpu_custom_call.1} parent=1 // pred_check
      _
    $region3: #{tpu_custom_call.1} parent=1 // pred_check_branch
      %11 = sbr.rel (0) target = $region5
    $region4: #{tpu_custom_call.1} parent=1 // pred_region
      %s13 = ssub.s32 2048, 2048
      %14 = vsyncadd [#allocation3], %s13
      %s15 = sshll.u32 [#allocation2], 4
      %s16 = int_to_ptr.vmem [resolvable:$true] %s15
      %21 = dma.hbm_to_vmem [thread:$0]  %s0, 2048, %s16, [#allocation3], 128, 128, 8
    $region5: #{tpu_custom_call.1} parent=1 // pred_fallthru
      _
    // Predicated region
    $region6: #{tpu_custom_call.1} parent=1 // pred_check
      _
    $region7: #{tpu_custom_call.1} parent=1 // pred_check_branch
      %23 = sbr.rel (0) target = $region9
    $region8: #{tpu_custom_call.1} parent=1 // pred_region
      %s25 = ssub.s32 512, 512
      %26 = vsyncadd [#allocation6], %s25
      %s27 = sshll.u32 [#allocation5], 4
      %s28 = int_to_ptr.vmem [resolvable:$true] %s27
      %33 = dma.hbm_to_vmem [thread:$0]  %s1, 512, %s28, [#allocation6], 128, 128, 8
    $region9: #{tpu_custom_call.1} parent=1 // pred_fallthru
      _
    // Predicated region
    $region10: #{tpu_custom_call.1} parent=1 // pred_check
      _
    $region11: #{tpu_custom_call.1} parent=1 // pred_check_branch
      %35 = sbr.rel (0) target = $region13
    $region12: #{tpu_custom_call.1} parent=1 // pred_region
      %36 = dma.done [#allocation3], 2048
    $region13: #{tpu_custom_call.1} parent=1 // pred_fallthru
      _
    // Predicated region
    $region14: #{tpu_custom_call.1} parent=1 // pred_check
      _
    $region15: #{tpu_custom_call.1} parent=1 // pred_check_branch
      %38 = sbr.rel (0) target = $region17
    $region16: #{tpu_custom_call.1} parent=1 // pred_region
      %39 = dma.done [#allocation6], 512
    $region17: #{tpu_custom_call.1} parent=1 // pred_fallthru
      _
    %v40 = vld [vmem:[#allocation5] sm:$0xff]
    %v41 = vld [vmem:[#allocation5 + $0x8] sm:$0xff]
    %v42 = vld [vmem:[#allocation5 + $0x10] sm:$0xff]
    %v43 = vld [vmem:[#allocation5 + $0x18] sm:$0xff]
    %v44 = vlaneseq
    %v45 = vand.u32 %v44, 127
    %vm46 = vcmp.ge.s32.totalorder %v45, 32
    %vm47 = vcmp.lt.s32.totalorder %v45, 64
    %vm48 = vmand %vm46, %vm47
    %v49 = vsel %vm48, 2.0, 1.0
    %v50 = vsel %vm48, -1.0, 0.0
    %v51 = vld [vmem:[#allocation2] sm:$0xff]
    %v52 = vld [vmem:[#allocation2 + $0x8] sm:$0xff]
    %vm53 = vcmask 261120
    %v55 = vsel %vm53, 0.0, 0
    %57 = vmatprep.subr.mxu0 0.0
    %58 = vmatpush1.msra.mxu0 %v40
    %59 = vmatprep.subr.mxu0 0.0
    %60 = vmatpush1.msra.mxu0 %v41
    %61 = vmatprep.subr.mxu0 0.0
    %62 = vmatpush1.msra.mxu0 %v42
    %63 = vmatprep.subr.mxu0 0.0
    %64 = vmatpush1.msra.mxu0 %v43
    %65 = vmatprep.subr.mxu0 0.0
    %66 = vmatpush1.msra.mxu0 0.0
    %67 = vmatprep.subr.mxu0 0.0
    %68 = vmatpush1.msra.mxu0 0.0
    %69 = vmatprep.subr.mxu0 0.0
    %70 = vmatpush1.msra.mxu0 0.0
    %71 = vmatprep.subr.mxu0 0.0
    %72 = vmatpush1.msra.mxu0 0.0
    %73 = vmatprep.subr.mxu0 0.0
    %74 = vmatpush1.msra.mxu0 0.0
    %75 = vmatprep.subr.mxu0 0.0
    %76 = vmatpush1.msra.mxu0 0.0
    %77 = vmatprep.subr.mxu0 0.0
    %78 = vmatpush1.msra.mxu0 0.0
    %79 = vmatprep.subr.mxu0 0.0
    %80 = vmatpush1.msra.mxu0 0.0
    %81 = vmatprep.subr.mxu0 0.0
    %82 = vmatpush1.msra.mxu0 0.0
    %83 = vmatprep.subr.mxu0 0.0
    %84 = vmatpush1.msra.mxu0 0.0
    %85 = vmatprep.subr.mxu0 0.0
    %86 = vmatpush1.msra.mxu0 0.0
    %87 = vmatprep.subr.mxu0 0.0
    %88 = vmatpush1.msra.mxu0 0.0
    %89 = vmatprep.subr.mxu0 0.0
    %90 = vmatpush1.msra.mxu0 0.0
    %91 = vmatprep.subr.mxu0 0.0
    %92 = vmatpush1.msra.mxu0 0.0
    %93 = vmatprep.subr.mxu0 0.0
    %94 = vmatpush1.msra.mxu0 0.0
    %95 = vmatprep.subr.mxu0 0.0
    %96 = vmatpush1.msra.mxu0 0.0
    %97 = vmatprep.subr.mxu0 0.0
    %98 = vmatpush1.msra.mxu0 0.0
    %99 = vmatprep.subr.mxu0 0.0
    %100 = vmatpush1.msra.mxu0 0.0
    %101 = vmatprep.subr.mxu0 0.0
    %102 = vmatpush1.msra.mxu0 0.0
    %103 = vmatprep.subr.mxu0 0.0
    %104 = vmatpush1.msra.mxu0 0.0
    %105 = vmatprep.subr.mxu0 0.0
    %106 = vmatpush1.msra.mxu0 0.0
    %107 = vmatprep.subr.mxu0 0.0
    %108 = vmatpush1.msra.mxu0 0.0
    %109 = vmatprep.subr.mxu0 0.0
    %110 = vmatpush1.msra.mxu0 0.0
    %111 = vmatprep.subr.mxu0 0.0
    %112 = vmatpush1.msra.mxu0 0.0
    %113 = vmatprep.subr.mxu0 0.0
    %114 = vmatpush1.msra.mxu0 0.0
    %115 = vmatprep.subr.mxu0 0.0
    %116 = vmatpush1.msra.mxu0 0.0
    %117 = vmatprep.subr.mxu0 0.0
    %118 = vmatpush1.msra.mxu0 0.0
    %119 = vmatprep.subr.mxu0 0.0
    %120 = vmatpush1.msra.mxu0 0.0
    %121 = vmatprep.mubr.f32.mxu0 0.0
    %122 = vmatmul.mubr.f32.gmra.mrb[0].mxu0 %v55
    %v123 = vpop.f32.mrb[0].mxu0
    %v124 = vadd.f32 %v51, %v123
    %v125 = vpop.f32.mrb[0].mxu0
    %126 = vmatprep.mubr.f32.mxu0 0.0
    %127 = vmatmul.mubr.f32.gmra.mrb[0].mxu0 %v55
    %v128 = vpop.f32.mrb[0].mxu0
    %v129 = vadd.f32 %v52, %v128
    %v130 = vpop.f32.mrb[0].mxu0
    %131 = vdwg.mxu0
    %v132 = vxor.u32 %v124, 2147483648
    %v133 = vxor.u32 %v129, 2147483648
    %v134 = vmul.f32 %v132, 1.442695
    %v135 = vpow.pop %v134
    %v136 = vmul.f32 %v133, 1.442695
    %v137 = vpow.pop %v136
    %v138 = vadd.f32 %v135, 1.0
    %v139 = vadd.f32 %v137, 1.0
    %v140 = vrcp.pop %v138
    %v141 = vmul.f32 1.0, %v140
    %v142 = vrcp.pop %v139
    %v143 = vmul.f32 1.0, %v142
    %v144 = vmul.f32 %v49, %v141
    %v145 = vmul.f32 %v49, %v143
    %v146 = vadd.f32 %v144, %v50
    %v147 = vadd.f32 %v145, %v50
    %150 = vrot.lane.b32.xlu0 %v146, 96
    %v151 = vpop.permute.xlu0 %150
    %152 = vrot.lane.b32.xlu0 %v147, 96
    %v153 = vpop.permute.xlu0 %152
    %v156 = vmul.f32 %v146, %v151
    %v157 = vmul.f32 %v147, %v153
    %v158 = vtanh.pop %v156
    %v159 = vtanh.pop %v157
    %162 = vrot.lane.b32.xlu0 %v158, 64
    %v163 = vpop.permute.xlu0 %162
    %164 = vrot.lane.b32.xlu0 %v159, 64
    %v165 = vpop.permute.xlu0 %164
    %v168 = vmul.f32 %v146, %v163
    %v169 = vmul.f32 %v147, %v165
    %172 = vrot.lane.b32.xlu0 %v168, 64
    %v173 = vpop.permute.xlu0 %172
    %174 = vrot.lane.b32.xlu0 %v169, 64
    %v175 = vpop.permute.xlu0 %174
    %178 = vst.msk [vmem:[#allocation7] sm:$0xff] %vm53, %v173
    %179 = vst.msk [vmem:[#allocation7 + $0x8] sm:$0xff] %vm53, %v175
    %s180 = scalar_lea.vmem [#allocation2], 16
    %v181 = vld [vmem:[%s180] sm:$0xff]
    %v182 = vld [vmem:[%s180 + $0x8] sm:$0xff]
    %v183 = vsel %vm53, %v173, 0
    %v185 = vsel %vm53, %v175, 0
    %187 = vmatprep.subr.mxu0 0.0
    %188 = vmatpush1.msra.mxu0 %v40
    %189 = vmatprep.subr.mxu0 0.0
    %190 = vmatpush1.msra.mxu0 %v41
    %191 = vmatprep.subr.mxu0 0.0
    %192 = vmatpush1.msra.mxu0 %v42
    %193 = vmatprep.subr.mxu0 0.0
    %194 = vmatpush1.msra.mxu0 %v43
    %195 = vmatprep.subr.mxu0 0.0
    %196 = vmatpush1.msra.mxu0 0.0
    %197 = vmatprep.subr.mxu0 0.0
    %198 = vmatpush1.msra.mxu0 0.0
    %199 = vmatprep.subr.mxu0 0.0
    %200 = vmatpush1.msra.mxu0 0.0
    %201 = vmatprep.subr.mxu0 0.0
    %202 = vmatpush1.msra.mxu0 0.0
    %203 = vmatprep.subr.mxu0 0.0
    %204 = vmatpush1.msra.mxu0 0.0
    %205 = vmatprep.subr.mxu0 0.0
    %206 = vmatpush1.msra.mxu0 0.0
    %207 = vmatprep.subr.mxu0 0.0
    %208 = vmatpush1.msra.mxu0 0.0
    %209 = vmatprep.subr.mxu0 0.0
    %210 = vmatpush1.msra.mxu0 0.0
    %211 = vmatprep.subr.mxu0 0.0
    %212 = vmatpush1.msra.mxu0 0.0
    %213 = vmatprep.subr.mxu0 0.0
    %214 = vmatpush1.msra.mxu0 0.0
    %215 = vmatprep.subr.mxu0 0.0
    %216 = vmatpush1.msra.mxu0 0.0
    %217 = vmatprep.subr.mxu0 0.0
    %218 = vmatpush1.msra.mxu0 0.0
    %219 = vmatprep.subr.mxu0 0.0
    %220 = vmatpush1.msra.mxu0 0.0
    %221 = vmatprep.subr.mxu0 0.0
    %222 = vmatpush1.msra.mxu0 0.0
    %223 = vmatprep.subr.mxu0 0.0
    %224 = vmatpush1.msra.mxu0 0.0
    %225 = vmatprep.subr.mxu0 0.0
    %226 = vmatpush1.msra.mxu0 0.0
    %227 = vmatprep.subr.mxu0 0.0
    %228 = vmatpush1.msra.mxu0 0.0
    %229 = vmatprep.subr.mxu0 0.0
    %230 = vmatpush1.msra.mxu0 0.0
    %231 = vmatprep.subr.mxu0 0.0
    %232 = vmatpush1.msra.mxu0 0.0
    %233 = vmatprep.subr.mxu0 0.0
    %234 = vmatpush1.msra.mxu0 0.0
    %235 = vmatprep.subr.mxu0 0.0
    %236 = vmatpush1.msra.mxu0 0.0
    %237 = vmatprep.subr.mxu0 0.0
    %238 = vmatpush1.msra.mxu0 0.0
    %239 = vmatprep.subr.mxu0 0.0
    %240 = vmatpush1.msra.mxu0 0.0
    %241 = vmatprep.subr.mxu0 0.0
    %242 = vmatpush1.msra.mxu0 0.0
    %243 = vmatprep.subr.mxu0 0.0
    %244 = vmatpush1.msra.mxu0 0.0
    %245 = vmatprep.subr.mxu0 0.0
    %246 = vmatpush1.msra.mxu0 0.0
    %247 = vmatprep.subr.mxu0 0.0
    %248 = vmatpush1.msra.mxu0 0.0
    %249 = vmatprep.subr.mxu0 0.0
    %250 = vmatpush1.msra.mxu0 0.0
    %251 = vmatprep.mubr.f32.mxu0 0.0
    %252 = vmatmul.mubr.f32.gmra.mrb[0].mxu0 %v183
    %v253 = vpop.f32.mrb[0].mxu0
    %v254 = vadd.f32 %v181, %v253
    %v255 = vpop.f32.mrb[0].mxu0
    %256 = vmatprep.mubr.f32.mxu0 0.0
    %257 = vmatmul.mubr.f32.gmra.mrb[0].mxu0 %v185
    %v258 = vpop.f32.mrb[0].mxu0
    %v259 = vadd.f32 %v182, %v258
    %v260 = vpop.f32.mrb[0].mxu0
    %261 = vdwg.mxu0
    %v262 = vxor.u32 %v254, 2147483648
    %v263 = vxor.u32 %v259, 2147483648
    %v264 = vmul.f32 %v262, 1.442695
    %v265 = vpow.pop %v264
    %v266 = vmul.f32 %v263, 1.442695
    %v267 = vpow.pop %v266
    %v268 = vadd.f32 %v265, 1.0
    %v269 = vadd.f32 %v267, 1.0
    %v270 = vrcp.pop %v268
    %v271 = vmul.f32 1.0, %v270
    %v272 = vrcp.pop %v269
    %v273 = vmul.f32 1.0, %v272
    %v274 = vmul.f32 %v49, %v271
    %v275 = vmul.f32 %v49, %v273
    %v276 = vadd.f32 %v274, %v50
    %v277 = vadd.f32 %v275, %v50
    %280 = vrot.lane.b32.xlu0 %v276, 96
    %v281 = vpop.permute.xlu0 %280
    %282 = vrot.lane.b32.xlu0 %v277, 96
    %v283 = vpop.permute.xlu0 %282
    %v286 = vmul.f32 %v276, %v281
    %v287 = vmul.f32 %v277, %v283
    %v288 = vtanh.pop %v286
    %v289 = vtanh.pop %v287
    %292 = vrot.lane.b32.xlu0 %v288, 64
    %v293 = vpop.permute.xlu0 %292
    %294 = vrot.lane.b32.xlu0 %v289, 64
    %v295 = vpop.permute.xlu0 %294
    %v298 = vmul.f32 %v276, %v293
    %v299 = vmul.f32 %v277, %v295
    %302 = vrot.lane.b32.xlu0 %v298, 64
    %v303 = vpop.permute.xlu0 %302
    %304 = vrot.lane.b32.xlu0 %v299, 64
    %v305 = vpop.permute.xlu0 %304
    %s308 = scalar_lea.vmem [#allocation7], 16
    %309 = vst.msk [vmem:[%s308] sm:$0xff] %vm53, %v303
    %310 = vst.msk [vmem:[%s308 + $0x8] sm:$0xff] %vm53, %v305
    %s311 = scalar_lea.vmem [#allocation2], 32
    %v312 = vld [vmem:[%s311] sm:$0xff]
    %v313 = vld [vmem:[%s311 + $0x8] sm:$0xff]
    %v314 = vsel %vm53, %v303, 0
    %v316 = vsel %vm53, %v305, 0
    %318 = vmatprep.subr.mxu0 0.0
    %319 = vmatpush1.msra.mxu0 %v40
    %320 = vmatprep.subr.mxu0 0.0
    %321 = vmatpush1.msra.mxu0 %v41
    %322 = vmatprep.subr.mxu0 0.0
    %323 = vmatpush1.msra.mxu0 %v42
    %324 = vmatprep.subr.mxu0 0.0
    %325 = vmatpush1.msra.mxu0 %v43
    %326 = vmatprep.subr.mxu0 0.0
    %327 = vmatpush1.msra.mxu0 0.0
    %328 = vmatprep.subr.mxu0 0.0
    %329 = vmatpush1.msra.mxu0 0.0
    %330 = vmatprep.subr.mxu0 0.0
    %331 = vmatpush1.msra.mxu0 0.0
    %332 = vmatprep.subr.mxu0 0.0
    %333 = vmatpush1.msra.mxu0 0.0
    %334 = vmatprep.subr.mxu0 0.0
    %335 = vmatpush1.msra.mxu0 0.0
    %336 = vmatprep.subr.mxu0 0.0
    %337 = vmatpush1.msra.mxu0 0.0
    %338 = vmatprep.subr.mxu0 0.0
    %339 = vmatpush1.msra.mxu0 0.0
    %340 = vmatprep.subr.mxu0 0.0
    %341 = vmatpush1.msra.mxu0 0.0
    %342 = vmatprep.subr.mxu0 0.0
    %343 = vmatpush1.msra.mxu0 0.0
    %344 = vmatprep.subr.mxu0 0.0
    %345 = vmatpush1.msra.mxu0 0.0
    %346 = vmatprep.subr.mxu0 0.0
    %347 = vmatpush1.msra.mxu0 0.0
    %348 = vmatprep.subr.mxu0 0.0
    %349 = vmatpush1.msra.mxu0 0.0
    %350 = vmatprep.subr.mxu0 0.0
    %351 = vmatpush1.msra.mxu0 0.0
    %352 = vmatprep.subr.mxu0 0.0
    %353 = vmatpush1.msra.mxu0 0.0
    %354 = vmatprep.subr.mxu0 0.0
    %355 = vmatpush1.msra.mxu0 0.0
    %356 = vmatprep.subr.mxu0 0.0
    %357 = vmatpush1.msra.mxu0 0.0
    %358 = vmatprep.subr.mxu0 0.0
    %359 = vmatpush1.msra.mxu0 0.0
    %360 = vmatprep.subr.mxu0 0.0
    %361 = vmatpush1.msra.mxu0 0.0
    %362 = vmatprep.subr.mxu0 0.0
    %363 = vmatpush1.msra.mxu0 0.0
    %364 = vmatprep.subr.mxu0 0.0
    %365 = vmatpush1.msra.mxu0 0.0
    %366 = vmatprep.subr.mxu0 0.0
    %367 = vmatpush1.msra.mxu0 0.0
    %368 = vmatprep.subr.mxu0 0.0
    %369 = vmatpush1.msra.mxu0 0.0
    %370 = vmatprep.subr.mxu0 0.0
    %371 = vmatpush1.msra.mxu0 0.0
    %372 = vmatprep.subr.mxu0 0.0
    %373 = vmatpush1.msra.mxu0 0.0
    %374 = vmatprep.subr.mxu0 0.0
    %375 = vmatpush1.msra.mxu0 0.0
    %376 = vmatprep.subr.mxu0 0.0
    %377 = vmatpush1.msra.mxu0 0.0
    %378 = vmatprep.subr.mxu0 0.0
    %379 = vmatpush1.msra.mxu0 0.0
    %380 = vmatprep.subr.mxu0 0.0
    %381 = vmatpush1.msra.mxu0 0.0
    %382 = vmatprep.mubr.f32.mxu0 0.0
    %383 = vmatmul.mubr.f32.gmra.mrb[0].mxu0 %v314
    %v384 = vpop.f32.mrb[0].mxu0
    %v385 = vadd.f32 %v312, %v384
    %v386 = vpop.f32.mrb[0].mxu0
    %387 = vmatprep.mubr.f32.mxu0 0.0
    %388 = vmatmul.mubr.f32.gmra.mrb[0].mxu0 %v316
    %v389 = vpop.f32.mrb[0].mxu0
    %v390 = vadd.f32 %v313, %v389
    %v391 = vpop.f32.mrb[0].mxu0
    %392 = vdwg.mxu0
    %v393 = vxor.u32 %v385, 2147483648
    %v394 = vxor.u32 %v390, 2147483648
    %v395 = vmul.f32 %v393, 1.442695
    %v396 = vpow.pop %v395
    %v397 = vmul.f32 %v394, 1.442695
    %v398 = vpow.pop %v397
    %v399 = vadd.f32 %v396, 1.0
    %v400 = vadd.f32 %v398, 1.0
    %v401 = vrcp.pop %v399
    %v402 = vmul.f32 1.0, %v401
    %v403 = vrcp.pop %v400
    %v404 = vmul.f32 1.0, %v403
    %v405 = vmul.f32 %v49, %v402
    %v406 = vmul.f32 %v49, %v404
    %v407 = vadd.f32 %v405, %v50
    %v408 = vadd.f32 %v406, %v50
    %411 = vrot.lane.b32.xlu0 %v407, 96
    %v412 = vpop.permute.xlu0 %411
    %413 = vrot.lane.b32.xlu0 %v408, 96
    %v414 = vpop.permute.xlu0 %413
    %v417 = vmul.f32 %v407, %v412
    %v418 = vmul.f32 %v408, %v414
    %v419 = vtanh.pop %v417
    %v420 = vtanh.pop %v418
    %423 = vrot.lane.b32.xlu0 %v419, 64
    %v424 = vpop.permute.xlu0 %423
    %425 = vrot.lane.b32.xlu0 %v420, 64
    %v426 = vpop.permute.xlu0 %425
    %v429 = vmul.f32 %v407, %v424
    %v430 = vmul.f32 %v408, %v426
    %433 = vrot.lane.b32.xlu0 %v429, 64
    %v434 = vpop.permute.xlu0 %433
    %435 = vrot.lane.b32.xlu0 %v430, 64
    %v436 = vpop.permute.xlu0 %435
    %s439 = scalar_lea.vmem [#allocation7], 32
    %440 = vst.msk [vmem:[%s439] sm:$0xff] %vm53, %v434
    %441 = vst.msk [vmem:[%s439 + $0x8] sm:$0xff] %vm53, %v436
    %s442 = scalar_lea.vmem [#allocation2], 48
    %v443 = vld [vmem:[%s442] sm:$0xff]
    %v444 = vld [vmem:[%s442 + $0x8] sm:$0xff]
    %v445 = vsel %vm53, %v434, 0
    %v447 = vsel %vm53, %v436, 0
    %449 = vmatprep.subr.mxu0 0.0
    %450 = vmatpush1.msra.mxu0 %v40
    %451 = vmatprep.subr.mxu0 0.0
    %452 = vmatpush1.msra.mxu0 %v41
    %453 = vmatprep.subr.mxu0 0.0
    %454 = vmatpush1.msra.mxu0 %v42
    %455 = vmatprep.subr.mxu0 0.0
    %456 = vmatpush1.msra.mxu0 %v43
    %457 = vmatprep.subr.mxu0 0.0
    %458 = vmatpush1.msra.mxu0 0.0
    %459 = vmatprep.subr.mxu0 0.0
    %460 = vmatpush1.msra.mxu0 0.0
    %461 = vmatprep.subr.mxu0 0.0
    %462 = vmatpush1.msra.mxu0 0.0
    %463 = vmatprep.subr.mxu0 0.0
    %464 = vmatpush1.msra.mxu0 0.0
    %465 = vmatprep.subr.mxu0 0.0
    %466 = vmatpush1.msra.mxu0 0.0
    %467 = vmatprep.subr.mxu0 0.0
    %468 = vmatpush1.msra.mxu0 0.0
    %469 = vmatprep.subr.mxu0 0.0
    %470 = vmatpush1.msra.mxu0 0.0
    %471 = vmatprep.subr.mxu0 0.0
    %472 = vmatpush1.msra.mxu0 0.0
    %473 = vmatprep.subr.mxu0 0.0
    %474 = vmatpush1.msra.mxu0 0.0
    %475 = vmatprep.subr.mxu0 0.0
    %476 = vmatpush1.msra.mxu0 0.0
    %477 = vmatprep.subr.mxu0 0.0
    %478 = vmatpush1.msra.mxu0 0.0
    %479 = vmatprep.subr.mxu0 0.0
    %480 = vmatpush1.msra.mxu0 0.0
    %481 = vmatprep.subr.mxu0 0.0
    %482 = vmatpush1.msra.mxu0 0.0
    %483 = vmatprep.subr.mxu0 0.0
    %484 = vmatpush1.msra.mxu0 0.0
    %485 = vmatprep.subr.mxu0 0.0
    %486 = vmatpush1.msra.mxu0 0.0
    %487 = vmatprep.subr.mxu0 0.0
    %488 = vmatpush1.msra.mxu0 0.0
    %489 = vmatprep.subr.mxu0 0.0
    %490 = vmatpush1.msra.mxu0 0.0
    %491 = vmatprep.subr.mxu0 0.0
    %492 = vmatpush1.msra.mxu0 0.0
    %493 = vmatprep.subr.mxu0 0.0
    %494 = vmatpush1.msra.mxu0 0.0
    %495 = vmatprep.subr.mxu0 0.0
    %496 = vmatpush1.msra.mxu0 0.0
    %497 = vmatprep.subr.mxu0 0.0
    %498 = vmatpush1.msra.mxu0 0.0
    %499 = vmatprep.subr.mxu0 0.0
    %500 = vmatpush1.msra.mxu0 0.0
    %501 = vmatprep.subr.mxu0 0.0
    %502 = vmatpush1.msra.mxu0 0.0
    %503 = vmatprep.subr.mxu0 0.0
    %504 = vmatpush1.msra.mxu0 0.0
    %505 = vmatprep.subr.mxu0 0.0
    %506 = vmatpush1.msra.mxu0 0.0
    %507 = vmatprep.subr.mxu0 0.0
    %508 = vmatpush1.msra.mxu0 0.0
    %509 = vmatprep.subr.mxu0 0.0
    %510 = vmatpush1.msra.mxu0 0.0
    %511 = vmatprep.subr.mxu0 0.0
    %512 = vmatpush1.msra.mxu0 0.0
    %513 = vmatprep.mubr.f32.mxu0 0.0
    %514 = vmatmul.mubr.f32.gmra.mrb[0].mxu0 %v445
    %v515 = vpop.f32.mrb[0].mxu0
    %v516 = vadd.f32 %v443, %v515
    %v517 = vpop.f32.mrb[0].mxu0
    %518 = vmatprep.mubr.f32.mxu0 0.0
    %519 = vmatmul.mubr.f32.gmra.mrb[0].mxu0 %v447
    %v520 = vpop.f32.mrb[0].mxu0
    %v521 = vadd.f32 %v444, %v520
    %v522 = vpop.f32.mrb[0].mxu0
    %523 = vdwg.mxu0
    %v524 = vxor.u32 %v516, 2147483648
    %v525 = vxor.u32 %v521, 2147483648
    %v526 = vmul.f32 %v524, 1.442695
    %v527 = vpow.pop %v526
    %v528 = vmul.f32 %v525, 1.442695
    %v529 = vpow.pop %v528
    %v530 = vadd.f32 %v527, 1.0
    %v531 = vadd.f32 %v529, 1.0
    %v532 = vrcp.pop %v530
    %v533 = vmul.f32 1.0, %v532
    %v534 = vrcp.pop %v531
    %v535 = vmul.f32 1.0, %v534
    %v536 = vmul.f32 %v49, %v533
    %v537 = vmul.f32 %v49, %v535
    %v538 = vadd.f32 %v536, %v50
    %v539 = vadd.f32 %v537, %v50
    %542 = vrot.lane.b32.xlu0 %v538, 96
    %v543 = vpop.permute.xlu0 %542
    %544 = vrot.lane.b32.xlu0 %v539, 96
    %v545 = vpop.permute.xlu0 %544
    %v548 = vmul.f32 %v538, %v543
    %v549 = vmul.f32 %v539, %v545
    %v550 = vtanh.pop %v548
    %v551 = vtanh.pop %v549
    %554 = vrot.lane.b32.xlu0 %v550, 64
    %v555 = vpop.permute.xlu0 %554
    %556 = vrot.lane.b32.xlu0 %v551, 64
    %v557 = vpop.permute.xlu0 %556
    %v560 = vmul.f32 %v538, %v555
    %v561 = vmul.f32 %v539, %v557
    %564 = vrot.lane.b32.xlu0 %v560, 64
    %v565 = vpop.permute.xlu0 %564
    %566 = vrot.lane.b32.xlu0 %v561, 64
    %v567 = vpop.permute.xlu0 %566
    %s570 = scalar_lea.vmem [#allocation7], 48
    %571 = vst.msk [vmem:[%s570] sm:$0xff] %vm53, %v565
    %572 = vst.msk [vmem:[%s570 + $0x8] sm:$0xff] %vm53, %v567
    %s573 = scalar_lea.vmem [#allocation2], 64
    %v574 = vld [vmem:[%s573] sm:$0xff]
    %v575 = vld [vmem:[%s573 + $0x8] sm:$0xff]
    %v576 = vsel %vm53, %v565, 0
    %v578 = vsel %vm53, %v567, 0
    %580 = vmatprep.subr.mxu0 0.0
    %581 = vmatpush1.msra.mxu0 %v40
    %582 = vmatprep.subr.mxu0 0.0
    %583 = vmatpush1.msra.mxu0 %v41
    %584 = vmatprep.subr.mxu0 0.0
    %585 = vmatpush1.msra.mxu0 %v42
    %586 = vmatprep.subr.mxu0 0.0
    %587 = vmatpush1.msra.mxu0 %v43
    %588 = vmatprep.subr.mxu0 0.0
    %589 = vmatpush1.msra.mxu0 0.0
    %590 = vmatprep.subr.mxu0 0.0
    %591 = vmatpush1.msra.mxu0 0.0
    %592 = vmatprep.subr.mxu0 0.0
    %593 = vmatpush1.msra.mxu0 0.0
    %594 = vmatprep.subr.mxu0 0.0
    %595 = vmatpush1.msra.mxu0 0.0
    %596 = vmatprep.subr.mxu0 0.0
    %597 = vmatpush1.msra.mxu0 0.0
    %598 = vmatprep.subr.mxu0 0.0
    %599 = vmatpush1.msra.mxu0 0.0
    %600 = vmatprep.subr.mxu0 0.0
    %601 = vmatpush1.msra.mxu0 0.0
    %602 = vmatprep.subr.mxu0 0.0
    %603 = vmatpush1.msra.mxu0 0.0
    %604 = vmatprep.subr.mxu0 0.0
    %605 = vmatpush1.msra.mxu0 0.0
    %606 = vmatprep.subr.mxu0 0.0
    %607 = vmatpush1.msra.mxu0 0.0
    %608 = vmatprep.subr.mxu0 0.0
    %609 = vmatpush1.msra.mxu0 0.0
    %610 = vmatprep.subr.mxu0 0.0
    %611 = vmatpush1.msra.mxu0 0.0
    %612 = vmatprep.subr.mxu0 0.0
    %613 = vmatpush1.msra.mxu0 0.0
    %614 = vmatprep.subr.mxu0 0.0
    %615 = vmatpush1.msra.mxu0 0.0
    %616 = vmatprep.subr.mxu0 0.0
    %617 = vmatpush1.msra.mxu0 0.0
    %618 = vmatprep.subr.mxu0 0.0
    %619 = vmatpush1.msra.mxu0 0.0
    %620 = vmatprep.subr.mxu0 0.0
    %621 = vmatpush1.msra.mxu0 0.0
    %622 = vmatprep.subr.mxu0 0.0
    %623 = vmatpush1.msra.mxu0 0.0
    %624 = vmatprep.subr.mxu0 0.0
    %625 = vmatpush1.msra.mxu0 0.0
    %626 = vmatprep.subr.mxu0 0.0
    %627 = vmatpush1.msra.mxu0 0.0
    %628 = vmatprep.subr.mxu0 0.0
    %629 = vmatpush1.msra.mxu0 0.0
    %630 = vmatprep.subr.mxu0 0.0
    %631 = vmatpush1.msra.mxu0 0.0
    %632 = vmatprep.subr.mxu0 0.0
    %633 = vmatpush1.msra.mxu0 0.0
    %634 = vmatprep.subr.mxu0 0.0
    %635 = vmatpush1.msra.mxu0 0.0
    %636 = vmatprep.subr.mxu0 0.0
    %637 = vmatpush1.msra.mxu0 0.0
    %638 = vmatprep.subr.mxu0 0.0
    %639 = vmatpush1.msra.mxu0 0.0
    %640 = vmatprep.subr.mxu0 0.0
    %641 = vmatpush1.msra.mxu0 0.0
    %642 = vmatprep.subr.mxu0 0.0
    %643 = vmatpush1.msra.mxu0 0.0
    %644 = vmatprep.mubr.f32.mxu0 0.0
    %645 = vmatmul.mubr.f32.gmra.mrb[0].mxu0 %v576
    %v646 = vpop.f32.mrb[0].mxu0
    %v647 = vadd.f32 %v574, %v646
    %v648 = vpop.f32.mrb[0].mxu0
    %649 = vmatprep.mubr.f32.mxu0 0.0
    %650 = vmatmul.mubr.f32.gmra.mrb[0].mxu0 %v578
    %v651 = vpop.f32.mrb[0].mxu0
    %v652 = vadd.f32 %v575, %v651
    %v653 = vpop.f32.mrb[0].mxu0
    %654 = vdwg.mxu0
    %v655 = vxor.u32 %v647, 2147483648
    %v656 = vxor.u32 %v652, 2147483648
    %v657 = vmul.f32 %v655, 1.442695
    %v658 = vpow.pop %v657
    %v659 = vmul.f32 %v656, 1.442695
    %v660 = vpow.pop %v659
    %v661 = vadd.f32 %v658, 1.0
    %v662 = vadd.f32 %v660, 1.0
    %v663 = vrcp.pop %v661
    %v664 = vmul.f32 1.0, %v663
    %v665 = vrcp.pop %v662
    %v666 = vmul.f32 1.0, %v665
    %v667 = vmul.f32 %v49, %v664
    %v668 = vmul.f32 %v49, %v666
    %v669 = vadd.f32 %v667, %v50
    %v670 = vadd.f32 %v668, %v50
    %673 = vrot.lane.b32.xlu0 %v669, 96
    %v674 = vpop.permute.xlu0 %673
    %675 = vrot.lane.b32.xlu0 %v670, 96
    %v676 = vpop.permute.xlu0 %675
    %v679 = vmul.f32 %v669, %v674
    %v680 = vmul.f32 %v670, %v676
    %v681 = vtanh.pop %v679
    %v682 = vtanh.pop %v680
    %685 = vrot.lane.b32.xlu0 %v681, 64
    %v686 = vpop.permute.xlu0 %685
    %687 = vrot.lane.b32.xlu0 %v682, 64
    %v688 = vpop.permute.xlu0 %687
    %v691 = vmul.f32 %v669, %v686
    %v692 = vmul.f32 %v670, %v688
    %695 = vrot.lane.b32.xlu0 %v691, 64
    %v696 = vpop.permute.xlu0 %695
    %697 = vrot.lane.b32.xlu0 %v692, 64
    %v698 = vpop.permute.xlu0 %697
    %s701 = scalar_lea.vmem [#allocation7], 64
    %702 = vst.msk [vmem:[%s701] sm:$0xff] %vm53, %v696
    %703 = vst.msk [vmem:[%s701 + $0x8] sm:$0xff] %vm53, %v698
    %s704 = scalar_lea.vmem [#allocation2], 80
    %v705 = vld [vmem:[%s704] sm:$0xff]
    %v706 = vld [vmem:[%s704 + $0x8] sm:$0xff]
    %v707 = vsel %vm53, %v696, 0
    %v709 = vsel %vm53, %v698, 0
    %711 = vmatprep.subr.mxu0 0.0
    %712 = vmatpush1.msra.mxu0 %v40
    %713 = vmatprep.subr.mxu0 0.0
    %714 = vmatpush1.msra.mxu0 %v41
    %715 = vmatprep.subr.mxu0 0.0
    %716 = vmatpush1.msra.mxu0 %v42
    %717 = vmatprep.subr.mxu0 0.0
    %718 = vmatpush1.msra.mxu0 %v43
    %719 = vmatprep.subr.mxu0 0.0
    %720 = vmatpush1.msra.mxu0 0.0
    %721 = vmatprep.subr.mxu0 0.0
    %722 = vmatpush1.msra.mxu0 0.0
    %723 = vmatprep.subr.mxu0 0.0
    %724 = vmatpush1.msra.mxu0 0.0
    %725 = vmatprep.subr.mxu0 0.0
    %726 = vmatpush1.msra.mxu0 0.0
    %727 = vmatprep.subr.mxu0 0.0
    %728 = vmatpush1.msra.mxu0 0.0
    %729 = vmatprep.subr.mxu0 0.0
    %730 = vmatpush1.msra.mxu0 0.0
    %731 = vmatprep.subr.mxu0 0.0
    %732 = vmatpush1.msra.mxu0 0.0
    %733 = vmatprep.subr.mxu0 0.0
    %734 = vmatpush1.msra.mxu0 0.0
    %735 = vmatprep.subr.mxu0 0.0
    %736 = vmatpush1.msra.mxu0 0.0
    %737 = vmatprep.subr.mxu0 0.0
    %738 = vmatpush1.msra.mxu0 0.0
    %739 = vmatprep.subr.mxu0 0.0
    %740 = vmatpush1.msra.mxu0 0.0
    %741 = vmatprep.subr.mxu0 0.0
    %742 = vmatpush1.msra.mxu0 0.0
    %743 = vmatprep.subr.mxu0 0.0
    %744 = vmatpush1.msra.mxu0 0.0
    %745 = vmatprep.subr.mxu0 0.0
    %746 = vmatpush1.msra.mxu0 0.0
    %747 = vmatprep.subr.mxu0 0.0
    %748 = vmatpush1.msra.mxu0 0.0
    %749 = vmatprep.subr.mxu0 0.0
    %750 = vmatpush1.msra.mxu0 0.0
    %751 = vmatprep.subr.mxu0 0.0
    %752 = vmatpush1.msra.mxu0 0.0
    %753 = vmatprep.subr.mxu0 0.0
    %754 = vmatpush1.msra.mxu0 0.0
    %755 = vmatprep.subr.mxu0 0.0
    %756 = vmatpush1.msra.mxu0 0.0
    %757 = vmatprep.subr.mxu0 0.0
    %758 = vmatpush1.msra.mxu0 0.0
    %759 = vmatprep.subr.mxu0 0.0
    %760 = vmatpush1.msra.mxu0 0.0
    %761 = vmatprep.subr.mxu0 0.0
    %762 = vmatpush1.msra.mxu0 0.0
    %763 = vmatprep.subr.mxu0 0.0
    %764 = vmatpush1.msra.mxu0 0.0
    %765 = vmatprep.subr.mxu0 0.0
    %766 = vmatpush1.msra.mxu0 0.0
    %767 = vmatprep.subr.mxu0 0.0
    %768 = vmatpush1.msra.mxu0 0.0
    %769 = vmatprep.subr.mxu0 0.0
    %770 = vmatpush1.msra.mxu0 0.0
    %771 = vmatprep.subr.mxu0 0.0
    %772 = vmatpush1.msra.mxu0 0.0
    %773 = vmatprep.subr.mxu0 0.0
    %774 = vmatpush1.msra.mxu0 0.0
    %775 = vmatprep.mubr.f32.mxu0 0.0
    %776 = vmatmul.mubr.f32.gmra.mrb[0].mxu0 %v707
    %v777 = vpop.f32.mrb[0].mxu0
    %v778 = vadd.f32 %v705, %v777
    %v779 = vpop.f32.mrb[0].mxu0
    %780 = vmatprep.mubr.f32.mxu0 0.0
    %781 = vmatmul.mubr.f32.gmra.mrb[0].mxu0 %v709
    %v782 = vpop.f32.mrb[0].mxu0
    %v783 = vadd.f32 %v706, %v782
    %v784 = vpop.f32.mrb[0].mxu0
    %785 = vdwg.mxu0
    %v786 = vxor.u32 %v778, 2147483648
    %v787 = vxor.u32 %v783, 2147483648
    %v788 = vmul.f32 %v786, 1.442695
    %v789 = vpow.pop %v788
    %v790 = vmul.f32 %v787, 1.442695
    %v791 = vpow.pop %v790
    %v792 = vadd.f32 %v789, 1.0
    %v793 = vadd.f32 %v791, 1.0
    %v794 = vrcp.pop %v792
    %v795 = vmul.f32 1.0, %v794
    %v796 = vrcp.pop %v793
    %v797 = vmul.f32 1.0, %v796
    %v798 = vmul.f32 %v49, %v795
    %v799 = vmul.f32 %v49, %v797
    %v800 = vadd.f32 %v798, %v50
    %v801 = vadd.f32 %v799, %v50
    %804 = vrot.lane.b32.xlu0 %v800, 96
    %v805 = vpop.permute.xlu0 %804
    %806 = vrot.lane.b32.xlu0 %v801, 96
    %v807 = vpop.permute.xlu0 %806
    %v810 = vmul.f32 %v800, %v805
    %v811 = vmul.f32 %v801, %v807
    %v812 = vtanh.pop %v810
    %v813 = vtanh.pop %v811
    %816 = vrot.lane.b32.xlu0 %v812, 64
    %v817 = vpop.permute.xlu0 %816
    %818 = vrot.lane.b32.xlu0 %v813, 64
    %v819 = vpop.permute.xlu0 %818
    %v822 = vmul.f32 %v800, %v817
    %v823 = vmul.f32 %v801, %v819
    %826 = vrot.lane.b32.xlu0 %v822, 64
    %v827 = vpop.permute.xlu0 %826
    %828 = vrot.lane.b32.xlu0 %v823, 64
    %v829 = vpop.permute.xlu0 %828
    %s832 = scalar_lea.vmem [#allocation7], 80
    %833 = vst.msk [vmem:[%s832] sm:$0xff] %vm53, %v827
    %834 = vst.msk [vmem:[%s832 + $0x8] sm:$0xff] %vm53, %v829
    %s835 = scalar_lea.vmem [#allocation2], 96
    %v836 = vld [vmem:[%s835] sm:$0xff]
    %v837 = vld [vmem:[%s835 + $0x8] sm:$0xff]
    %v838 = vsel %vm53, %v827, 0
    %v840 = vsel %vm53, %v829, 0
    %842 = vmatprep.subr.mxu0 0.0
    %843 = vmatpush1.msra.mxu0 %v40
    %844 = vmatprep.subr.mxu0 0.0
    %845 = vmatpush1.msra.mxu0 %v41
    %846 = vmatprep.subr.mxu0 0.0
    %847 = vmatpush1.msra.mxu0 %v42
    %848 = vmatprep.subr.mxu0 0.0
    %849 = vmatpush1.msra.mxu0 %v43
    %850 = vmatprep.subr.mxu0 0.0
    %851 = vmatpush1.msra.mxu0 0.0
    %852 = vmatprep.subr.mxu0 0.0
    %853 = vmatpush1.msra.mxu0 0.0
    %854 = vmatprep.subr.mxu0 0.0
    %855 = vmatpush1.msra.mxu0 0.0
    %856 = vmatprep.subr.mxu0 0.0
    %857 = vmatpush1.msra.mxu0 0.0
    %858 = vmatprep.subr.mxu0 0.0
    %859 = vmatpush1.msra.mxu0 0.0
    %860 = vmatprep.subr.mxu0 0.0
    %861 = vmatpush1.msra.mxu0 0.0
    %862 = vmatprep.subr.mxu0 0.0
    %863 = vmatpush1.msra.mxu0 0.0
    %864 = vmatprep.subr.mxu0 0.0
    %865 = vmatpush1.msra.mxu0 0.0
    %866 = vmatprep.subr.mxu0 0.0
    %867 = vmatpush1.msra.mxu0 0.0
    %868 = vmatprep.subr.mxu0 0.0
    %869 = vmatpush1.msra.mxu0 0.0
    %870 = vmatprep.subr.mxu0 0.0
    %871 = vmatpush1.msra.mxu0 0.0
    %872 = vmatprep.subr.mxu0 0.0
    %873 = vmatpush1.msra.mxu0 0.0
    %874 = vmatprep.subr.mxu0 0.0
    %875 = vmatpush1.msra.mxu0 0.0
    %876 = vmatprep.subr.mxu0 0.0
    %877 = vmatpush1.msra.mxu0 0.0
    %878 = vmatprep.subr.mxu0 0.0
    %879 = vmatpush1.msra.mxu0 0.0
    %880 = vmatprep.subr.mxu0 0.0
    %881 = vmatpush1.msra.mxu0 0.0
    %882 = vmatprep.subr.mxu0 0.0
    %883 = vmatpush1.msra.mxu0 0.0
    %884 = vmatprep.subr.mxu0 0.0
    %885 = vmatpush1.msra.mxu0 0.0
    %886 = vmatprep.subr.mxu0 0.0
    %887 = vmatpush1.msra.mxu0 0.0
    %888 = vmatprep.subr.mxu0 0.0
    %889 = vmatpush1.msra.mxu0 0.0
    %890 = vmatprep.subr.mxu0 0.0
    %891 = vmatpush1.msra.mxu0 0.0
    %892 = vmatprep.subr.mxu0 0.0
    %893 = vmatpush1.msra.mxu0 0.0
    %894 = vmatprep.subr.mxu0 0.0
    %895 = vmatpush1.msra.mxu0 0.0
    %896 = vmatprep.subr.mxu0 0.0
    %897 = vmatpush1.msra.mxu0 0.0
    %898 = vmatprep.subr.mxu0 0.0
    %899 = vmatpush1.msra.mxu0 0.0
    %900 = vmatprep.subr.mxu0 0.0
    %901 = vmatpush1.msra.mxu0 0.0
    %902 = vmatprep.subr.mxu0 0.0
    %903 = vmatpush1.msra.mxu0 0.0
    %904 = vmatprep.subr.mxu0 0.0
    %905 = vmatpush1.msra.mxu0 0.0
    %906 = vmatprep.mubr.f32.mxu0 0.0
    %907 = vmatmul.mubr.f32.gmra.mrb[0].mxu0 %v838
    %v908 = vpop.f32.mrb[0].mxu0
    %v909 = vadd.f32 %v836, %v908
    %v910 = vpop.f32.mrb[0].mxu0
    %911 = vmatprep.mubr.f32.mxu0 0.0
    %912 = vmatmul.mubr.f32.gmra.mrb[0].mxu0 %v840
    %v913 = vpop.f32.mrb[0].mxu0
    %v914 = vadd.f32 %v837, %v913
    %v915 = vpop.f32.mrb[0].mxu0
    %916 = vdwg.mxu0
    %v917 = vxor.u32 %v909, 2147483648
    %v918 = vxor.u32 %v914, 2147483648
    %v919 = vmul.f32 %v917, 1.442695
    %v920 = vpow.pop %v919
    %v921 = vmul.f32 %v918, 1.442695
    %v922 = vpow.pop %v921
    %v923 = vadd.f32 %v920, 1.0
    %v924 = vadd.f32 %v922, 1.0
    %v925 = vrcp.pop %v923
    %v926 = vmul.f32 1.0, %v925
    %v927 = vrcp.pop %v924
    %v928 = vmul.f32 1.0, %v927
    %v929 = vmul.f32 %v49, %v926
    %v930 = vmul.f32 %v49, %v928
    %v931 = vadd.f32 %v929, %v50
    %v932 = vadd.f32 %v930, %v50
    %935 = vrot.lane.b32.xlu0 %v931, 96
    %v936 = vpop.permute.xlu0 %935
    %937 = vrot.lane.b32.xlu0 %v932, 96
    %v938 = vpop.permute.xlu0 %937
    %v941 = vmul.f32 %v931, %v936
    %v942 = vmul.f32 %v932, %v938
    %v943 = vtanh.pop %v941
    %v944 = vtanh.pop %v942
    %947 = vrot.lane.b32.xlu0 %v943, 64
    %v948 = vpop.permute.xlu0 %947
    %949 = vrot.lane.b32.xlu0 %v944, 64
    %v950 = vpop.permute.xlu0 %949
    %v953 = vmul.f32 %v931, %v948
    %v954 = vmul.f32 %v932, %v950
    %957 = vrot.lane.b32.xlu0 %v953, 64
    %v958 = vpop.permute.xlu0 %957
    %959 = vrot.lane.b32.xlu0 %v954, 64
    %v960 = vpop.permute.xlu0 %959
    %s963 = scalar_lea.vmem [#allocation7], 96
    %964 = vst.msk [vmem:[%s963] sm:$0xff] %vm53, %v958
    %965 = vst.msk [vmem:[%s963 + $0x8] sm:$0xff] %vm53, %v960
    %s966 = scalar_lea.vmem [#allocation2], 112
    %v967 = vld [vmem:[%s966] sm:$0xff]
    %v968 = vld [vmem:[%s966 + $0x8] sm:$0xff]
    %v969 = vsel %vm53, %v958, 0
    %v971 = vsel %vm53, %v960, 0
    %973 = vmatprep.subr.mxu0 0.0
    %974 = vmatpush1.msra.mxu0 %v40
    %975 = vmatprep.subr.mxu0 0.0
    %976 = vmatpush1.msra.mxu0 %v41
    %977 = vmatprep.subr.mxu0 0.0
    %978 = vmatpush1.msra.mxu0 %v42
    %979 = vmatprep.subr.mxu0 0.0
    %980 = vmatpush1.msra.mxu0 %v43
    %981 = vmatprep.subr.mxu0 0.0
    %982 = vmatpush1.msra.mxu0 0.0
    %983 = vmatprep.subr.mxu0 0.0
    %984 = vmatpush1.msra.mxu0 0.0
    %985 = vmatprep.subr.mxu0 0.0
    %986 = vmatpush1.msra.mxu0 0.0
    %987 = vmatprep.subr.mxu0 0.0
    %988 = vmatpush1.msra.mxu0 0.0
    %989 = vmatprep.subr.mxu0 0.0
    %990 = vmatpush1.msra.mxu0 0.0
    %991 = vmatprep.subr.mxu0 0.0
    %992 = vmatpush1.msra.mxu0 0.0
    %993 = vmatprep.subr.mxu0 0.0
    %994 = vmatpush1.msra.mxu0 0.0
    %995 = vmatprep.subr.mxu0 0.0
    %996 = vmatpush1.msra.mxu0 0.0
    %997 = vmatprep.subr.mxu0 0.0
    %998 = vmatpush1.msra.mxu0 0.0
    %999 = vmatprep.subr.mxu0 0.0
    %1000 = vmatpush1.msra.mxu0 0.0
    %1001 = vmatprep.subr.mxu0 0.0
    %1002 = vmatpush1.msra.mxu0 0.0
    %1003 = vmatprep.subr.mxu0 0.0
    %1004 = vmatpush1.msra.mxu0 0.0
    %1005 = vmatprep.subr.mxu0 0.0
    %1006 = vmatpush1.msra.mxu0 0.0
    %1007 = vmatprep.subr.mxu0 0.0
    %1008 = vmatpush1.msra.mxu0 0.0
    %1009 = vmatprep.subr.mxu0 0.0
    %1010 = vmatpush1.msra.mxu0 0.0
    %1011 = vmatprep.subr.mxu0 0.0
    %1012 = vmatpush1.msra.mxu0 0.0
    %1013 = vmatprep.subr.mxu0 0.0
    %1014 = vmatpush1.msra.mxu0 0.0
    %1015 = vmatprep.subr.mxu0 0.0
    %1016 = vmatpush1.msra.mxu0 0.0
    %1017 = vmatprep.subr.mxu0 0.0
    %1018 = vmatpush1.msra.mxu0 0.0
    %1019 = vmatprep.subr.mxu0 0.0
    %1020 = vmatpush1.msra.mxu0 0.0
    %1021 = vmatprep.subr.mxu0 0.0
    %1022 = vmatpush1.msra.mxu0 0.0
    %1023 = vmatprep.subr.mxu0 0.0
    %1024 = vmatpush1.msra.mxu0 0.0
    %1025 = vmatprep.subr.mxu0 0.0
    %1026 = vmatpush1.msra.mxu0 0.0
    %1027 = vmatprep.subr.mxu0 0.0
    %1028 = vmatpush1.msra.mxu0 0.0
    %1029 = vmatprep.subr.mxu0 0.0
    %1030 = vmatpush1.msra.mxu0 0.0
    %1031 = vmatprep.subr.mxu0 0.0
    %1032 = vmatpush1.msra.mxu0 0.0
    %1033 = vmatprep.subr.mxu0 0.0
    %1034 = vmatpush1.msra.mxu0 0.0
    %1035 = vmatprep.subr.mxu0 0.0
    %1036 = vmatpush1.msra.mxu0 0.0
    %1037 = vmatprep.mubr.f32.mxu0 0.0
    %1038 = vmatmul.mubr.f32.gmra.mrb[0].mxu0 %v969
    %v1039 = vpop.f32.mrb[0].mxu0
    %v1040 = vadd.f32 %v967, %v1039
    %v1041 = vpop.f32.mrb[0].mxu0
    %1042 = vmatprep.mubr.f32.mxu0 0.0
    %1043 = vmatmul.mubr.f32.gmra.mrb[0].mxu0 %v971
    %v1044 = vpop.f32.mrb[0].mxu0
    %v1045 = vadd.f32 %v968, %v1044
    %v1046 = vpop.f32.mrb[0].mxu0
    %1047 = vdwg.mxu0
    %v1048 = vxor.u32 %v1040, 2147483648
    %v1049 = vxor.u32 %v1045, 2147483648
    %v1050 = vmul.f32 %v1048, 1.442695
    %v1051 = vpow.pop %v1050
    %v1052 = vmul.f32 %v1049, 1.442695
    %v1053 = vpow.pop %v1052
    %v1054 = vadd.f32 %v1051, 1.0
    %v1055 = vadd.f32 %v1053, 1.0
    %v1056 = vrcp.pop %v1054
    %v1057 = vmul.f32 1.0, %v1056
    %v1058 = vrcp.pop %v1055
    %v1059 = vmul.f32 1.0, %v1058
    %v1060 = vmul.f32 %v49, %v1057
    %v1061 = vmul.f32 %v49, %v1059
    %v1062 = vadd.f32 %v1060, %v50
    %v1063 = vadd.f32 %v1061, %v50
    %1066 = vrot.lane.b32.xlu0 %v1062, 96
    %v1067 = vpop.permute.xlu0 %1066
    %1068 = vrot.lane.b32.xlu0 %v1063, 96
    %v1069 = vpop.permute.xlu0 %1068
    %v1072 = vmul.f32 %v1062, %v1067
    %v1073 = vmul.f32 %v1063, %v1069
    %v1074 = vtanh.pop %v1072
    %v1075 = vtanh.pop %v1073
    %1078 = vrot.lane.b32.xlu0 %v1074, 64
    %v1079 = vpop.permute.xlu0 %1078
    %1080 = vrot.lane.b32.xlu0 %v1075, 64
    %v1081 = vpop.permute.xlu0 %1080
    %v1084 = vmul.f32 %v1062, %v1079
    %v1085 = vmul.f32 %v1063, %v1081
    %1088 = vrot.lane.b32.xlu0 %v1084, 64
    %v1089 = vpop.permute.xlu0 %1088
    %1090 = vrot.lane.b32.xlu0 %v1085, 64
    %v1091 = vpop.permute.xlu0 %1090
    %s1094 = scalar_lea.vmem [#allocation7], 112
    %1095 = vst.msk [vmem:[%s1094] sm:$0xff] %vm53, %v1089
    %1096 = vst.msk [vmem:[%s1094 + $0x8] sm:$0xff] %vm53, %v1091
    // Predicated region
    $region18: #{tpu_custom_call.1} parent=1 // pred_check
      _
    $region19: #{tpu_custom_call.1} parent=1 // pred_check_branch
      %1098 = sbr.rel (0) target = $region21
    $region20: #{tpu_custom_call.1} parent=1 // pred_region
      %s1100 = ssub.s32 2048, 2048
      %1101 = vsyncadd [#allocation4], %s1100
      %s1102 = sshll.u32 [#allocation7], 4
      %s1103 = int_to_ptr.vmem [resolvable:$true] %s1102
      %1108 = dma.vmem_to_hbm [thread:$0]  %s1103, 2048, %s2, [#allocation4], 128, 128, 8
    $region21: #{tpu_custom_call.1} parent=1 // pred_fallthru
      _
    // Predicated region
    $region22: #{tpu_custom_call.1} parent=1 // pred_check
      _
    $region23: #{tpu_custom_call.1} parent=1 // pred_check_branch
      %1110 = sbr.rel (0) target = $region25
    $region24: #{tpu_custom_call.1} parent=1 // pred_region
      %1111 = dma.done [#allocation4], 2048
    $region25: #{tpu_custom_call.1} parent=1 // pred_fallthru
      _
    %1112 = vsyncpa [#allocation3], 1
    %1113 = vsyncpa [#allocation6], 1
    %1114 = vsyncpa [#allocation4], 1

</llo_original>
